<compile_context>
chip_gen: v5e
topology: v5e:2x2
jax: 0.10.0
libtpu: 0.0.40
codegen_flags: <defaults>
</compile_context>

<pallas_src>
import functools

import jax
import jax.numpy as jnp
from jax.experimental import pallas as pl
from jax.experimental.pallas import tpu as pltpu


def _mha_kernel(x_ref, wqkv_ref, wo_ref, bo_ref, o_ref, ctx_ref, *, num_heads, head_dim):
    # x_ref block: (Bb, T, d_in); wqkv: (d_in, 3*d_out); wo: (d_out, d_out); bo: (1, d_out)
    # ctx_ref (scratch): (Bb*T, d_out) f32 context slab.
    Bb, T, d_in = x_ref.shape
    H, hd = num_heads, head_dim
    d_out = H * hd
    mxu_dt = x_ref.dtype                        # f32 or bf16 (MXU operand dtype)
    scale = 1.0 / (hd ** 0.5)
    NEG = jnp.float32(-1e30)                    # finite mask value (no inf/NaN hazards)

    # --- Fused QKV projection over all Bb*T rows: one MXU matmul, f32 accumulation,
    # --- then a single cast to the operand dtype (bf16 path keeps qkv bf16 from here on).
    x2 = x_ref[...].reshape(Bb * T, d_in)
    qkv = jnp.dot(x2, wqkv_ref[...], preferred_element_type=jnp.float32).astype(mxu_dt)
    q_all = qkv[:, 0 * d_out:1 * d_out]         # (Bb*T, d_out)
    k_all = qkv[:, 1 * d_out:2 * d_out]
    v_all = qkv[:, 2 * d_out:3 * d_out]

    # --- Single (T, T) causal mask, hoisted outside the head loop (no head mask, no %//).
    rows = jax.lax.broadcasted_iota(jnp.int32, (T, T), 0)
    cols = jax.lax.broadcasted_iota(jnp.int32, (T, T), 1)
    causal = (cols <= rows)[None, :, :]         # (1, T, T); broadcasts over the batch dim

    # --- Per-head attention; batch rides the dot_general batch dimension.  The loop is a
    # --- static unroll over the (small) head count; each head's scores/probs die within
    # --- the iteration and the context lands in the VMEM scratch slab.
    for h in range(H):
        sl = slice(h * hd, (h + 1) * hd)
        q = q_all[:, sl].reshape(Bb, T, hd)     # leading-dim reshape only (minor dim kept)
        k = k_all[:, sl].reshape(Bb, T, hd)
        v = v_all[:, sl].reshape(Bb, T, hd)

        # Scores for this head, all batches at once: (Bb, T, T) = q @ k^T (f32 accum).
        s = jax.lax.dot_general(q, k, (((2,), (2,)), ((0,), (0,))),
                                preferred_element_type=jnp.float32)
        s = jnp.where(causal, s * scale, NEG)

        # Softmax in f32; divide -> EUP approximate reciprocal.
        m = jnp.max(s, axis=-1, keepdims=True)
        e = jnp.exp(s - m)
        p = e * pl.reciprocal(jnp.sum(e, axis=-1, keepdims=True), approx=True)
        # Attention dropout: identity (eval mode / p = 0.0).

        # Per-head context (Bb, T, hd) -> head columns of the context slab.
        ctx_h = jax.lax.dot_general(p.astype(mxu_dt), v, (((2,), (1,)), ((0,), (0,))),
                                    preferred_element_type=jnp.float32)
        ctx_ref[:, sl] = ctx_h.reshape(Bb * T, hd)

    # --- Output projection (bias kept in f32), one matmul over all Bb*T rows.
    out = jnp.dot(ctx_ref[...].astype(wo_ref.dtype), wo_ref[...],
                  preferred_element_type=jnp.float32) + bo_ref[...]
    o_ref[...] = out.reshape(Bb, T, d_out).astype(o_ref.dtype)


def _default_vmem_limit_bytes():
    # Generation-aware VMEM cap: ~3/4 of physical VMEM (≈96 MiB on 128-MiB v5e/v6e,
    # ≈48 MiB on 64-MiB v7x).  Falls back to 96 MiB if the query is unavailable.
    cap = 128 * 1024 * 1024
    try:
        cap = int(getattr(pltpu.get_tpu_info(), "vmem_capacity_bytes", cap))
    except Exception:
        pass
    return (cap * 3) // 4


def _tensorcores_per_chip():
    # v5e / v6e expose a single TensorCore per chip; v7x-class parts have two.
    try:
        kind = jax.devices()[0].device_kind.lower()
        return 2 if "v7" in kind else 1
    except Exception:
        return 1


def multi_head_attention(x, wq, wk, wv, wo, bo, *, num_heads,
                         batch_block=None, compute_dtype=None):
    """Causal multi-head attention forward pass.

    x: (B, T, d_in); wq/wk/wv: (d_in, d_out); wo: (d_out, d_out); bo: (d_out,).
    compute_dtype: optionally cast activations/weights (e.g. jnp.bfloat16) for MXU
    throughput on v6e/v7x; accumulation stays f32.  Output keeps x's original dtype.
    """
    B, T, d_in = x.shape
    d_out = wq.shape[1]
    assert d_out % num_heads == 0, "d_out must be divisible by num_heads"
    head_dim = d_out // num_heads

    # Grid over batch blocks.  Default: one grid step (whole batch folded into the matmul
    # M dimension) — on single-TC chips an extra grid step is pure overhead at small
    # shapes.  Only split into 2 parallel blocks when a second TensorCore exists.
    if batch_block is None:
        batch_block = B
        if _tensorcores_per_chip() >= 2 and B % 2 == 0 and B >= 2:
            batch_block = B // 2
    assert B % batch_block == 0
    grid = (B // batch_block,)

    wqkv = jnp.concatenate([wq, wk, wv], axis=1)       # (d_in, 3*d_out) fused QKV weight
    bo2 = bo.reshape(1, d_out).astype(jnp.float32)     # bias stays f32
    out_dtype = x.dtype
    if compute_dtype is not None:
        x = x.astype(compute_dtype)
        wqkv = wqkv.astype(compute_dtype)
        wo = wo.astype(compute_dtype)

    kernel = functools.partial(_mha_kernel, num_heads=num_heads, head_dim=head_dim)
    # Grid-invariant weights/bias: whole-array VMEM residents (single copy, not part of
    # the per-step pipeline, i.e. not double-buffered).
    weight_spec = pl.BlockSpec(memory_space=pltpu.MemorySpace.VMEM)

    return pl.pallas_call(
        kernel,
        out_shape=jax.ShapeDtypeStruct((B, T, d_out), out_dtype),
        grid_spec=pltpu.PrefetchScalarGridSpec(
            num_scalar_prefetch=0,
            grid=grid,
            in_specs=[
                pl.BlockSpec((batch_block, T, d_in), lambda b: (b, 0, 0)),
                weight_spec,    # wqkv
                weight_spec,    # wo
                weight_spec,    # bo
            ],
            out_specs=pl.BlockSpec((batch_block, T, d_out), lambda b: (b, 0, 0)),
            scratch_shapes=[pltpu.VMEM((batch_block * T, d_out), jnp.float32)],
        ),
        compiler_params=pltpu.CompilerParams(
            dimension_semantics=("parallel",),
            vmem_limit_bytes=_default_vmem_limit_bytes(),
        ),
    )(x, wqkv, wo, bo2)


def _reference(x, wq, wk, wv, wo, bo, *, num_heads):
    B, T, d_in = x.shape
    d_out = wq.shape[1]
    hd = d_out // num_heads
    q = (x @ wq).reshape(B, T, num_heads, hd).transpose(0, 2, 1, 3)
    k = (x @ wk).reshape(B, T, num_heads, hd).transpose(0, 2, 1, 3)
    v = (x @ wv).reshape(B, T, num_heads, hd).transpose(0, 2, 1, 3)
    s = jnp.einsum('bhtd,bhsd->bhts', q, k) / (hd ** 0.5)
    mask = jnp.triu(jnp.ones((T, T), bool), k=1)
    s = jnp.where(mask[None, None], -jnp.inf, s)
    a = jax.nn.softmax(s, axis=-1)
    ctx = jnp.einsum('bhts,bhsd->bhtd', a, v).transpose(0, 2, 1, 3).reshape(B, T, d_out)
    return ctx @ wo + bo


if __name__ == "__main__":
    # Module config: d_in=32, d_out=32, context_length=8, dropout=0.0, num_heads=4
    B, T, d_in, d_out, num_heads = 2, 8, 32, 32, 4

    key = jax.random.PRNGKey(0)
    kx, kq, kk, kv, ko, kb = jax.random.split(key, 6)
    x = jax.random.normal(kx, (B, T, d_in), dtype=jnp.float32)
    scale = 1.0 / (d_in ** 0.5)
    wq = jax.random.normal(kq, (d_in, d_out), dtype=jnp.float32) * scale
    wk = jax.random.normal(kk, (d_in, d_out), dtype=jnp.float32) * scale
    wv = jax.random.normal(kv, (d_in, d_out), dtype=jnp.float32) * scale
    wo = jax.random.normal(ko, (d_out, d_out), dtype=jnp.float32) * scale
    bo = jax.random.normal(kb, (d_out,), dtype=jnp.float32) * 0.01

    ref = _reference(x, wq, wk, wv, wo, bo, num_heads=num_heads)

    # f32 operand path (tolerance accounts for the EUP approximate reciprocal in softmax).
    out = multi_head_attention(x, wq, wk, wv, wo, bo, num_heads=num_heads)
    out = jax.block_until_ready(out)
    assert out.shape == (B, T, d_out)
    assert jnp.allclose(out, ref, atol=1e-2, rtol=1e-2), "f32 path mismatch vs reference"

    # bf16 MXU-operand path (v6e/v7x throughput path); f32 accumulation, looser tolerance.
    out_bf16 = multi_head_attention(x, wq, wk, wv, wo, bo, num_heads=num_heads,
                                    compute_dtype=jnp.bfloat16)
    out_bf16 = jax.block_until_ready(out_bf16)
    assert jnp.allclose(out_bf16.astype(jnp.float32), ref, atol=5e-2, rtol=5e-2), \
        "bf16 path mismatch vs reference"

    print("KERNEL_OK")
</pallas_src>

<mosaic_0001>
module attributes {stable_mosaic.version = 11 : i64} {
  func.func @_mha_kernel(%arg0: i32, %arg1: memref<2x8x32xf32, #tpu.memory_space<vmem>>, %arg2: memref<32x96xf32, #tpu.memory_space<vmem>>, %arg3: memref<32x32xf32, #tpu.memory_space<vmem>>, %arg4: memref<1x32xf32, #tpu.memory_space<vmem>>, %arg5: memref<2x8x32xf32, #tpu.memory_space<vmem>>, %arg6: memref<16x32xf32, #tpu.memory_space<vmem>>) attributes {dimension_semantics = [#tpu.dimension_semantics<parallel>], iteration_bounds = array<i64: 1>, scalar_prefetch = 0 : i64, scratch_operands = 1 : i64, tpu.core_type = #tpu.core_type<tc>, window_params = [{transform_indices = @transform_0, window_bounds = array<i64: 2, 8, 32>}, {pipeline_mode = #tpu.pipeline_mode<synchronous>, transform_indices = @transform_1, window_bounds = array<i64: 32, 96>}, {pipeline_mode = #tpu.pipeline_mode<synchronous>, transform_indices = @transform_2, window_bounds = array<i64: 32, 32>}, {pipeline_mode = #tpu.pipeline_mode<synchronous>, transform_indices = @transform_3, window_bounds = array<i64: 1, 32>}, {transform_indices = @transform_4, window_bounds = array<i64: 2, 8, 32>}]} {
    %c0 = arith.constant 0 : index
    %c0_0 = arith.constant 0 : index
    %c0_1 = arith.constant 0 : index
    %0 = vector.load %arg1[%c0, %c0_0, %c0_1] : memref<2x8x32xf32, #tpu.memory_space<vmem>>, vector<2x8x32xf32>
    %1 = vector.shape_cast %0 : vector<2x8x32xf32> to vector<16x32xf32>
    %c0_2 = arith.constant 0 : index
    %c0_3 = arith.constant 0 : index
    %2 = vector.load %arg2[%c0_2, %c0_3] : memref<32x96xf32, #tpu.memory_space<vmem>>, vector<32x96xf32>
    %cst = arith.constant dense<0.000000e+00> : vector<16x96xf32>
    %3 = tpu.matmul %1, %2, %cst {dimension_numbers = #tpu.dot_dimension_numbers<[1], [0], [0], [1], [0, 0, 1, 1], [], []>} : vector<16x32xf32>, vector<32x96xf32>, vector<16x96xf32> -> vector<16x96xf32>
    %4 = vector.extract_strided_slice %3 {offsets = [0, 0], sizes = [16, 32], strides = [1, 1]} : vector<16x96xf32> to vector<16x32xf32>
    %5 = vector.extract_strided_slice %3 {offsets = [0, 32], sizes = [16, 32], strides = [1, 1]} : vector<16x96xf32> to vector<16x32xf32>
    %6 = vector.extract_strided_slice %3 {offsets = [0, 64], sizes = [16, 32], strides = [1, 1]} : vector<16x96xf32> to vector<16x32xf32>
    %7 = tpu.iota {dimensions = array<i32: 0>} : vector<8x8xi32>
    %8 = tpu.iota {dimensions = array<i32: 1>} : vector<8x8xi32>
    %9 = arith.cmpi sle, %8, %7 : vector<8x8xi32>
    %10 = vector.shape_cast %9 : vector<8x8xi1> to vector<1x8x8xi1>
    %11 = vector.extract_strided_slice %4 {offsets = [0, 0], sizes = [16, 8], strides = [1, 1]} : vector<16x32xf32> to vector<16x8xf32>
    %12 = vector.shape_cast %11 : vector<16x8xf32> to vector<2x8x8xf32>
    %13 = vector.extract_strided_slice %5 {offsets = [0, 0], sizes = [16, 8], strides = [1, 1]} : vector<16x32xf32> to vector<16x8xf32>
    %14 = vector.shape_cast %13 : vector<16x8xf32> to vector<2x8x8xf32>
    %15 = vector.extract_strided_slice %6 {offsets = [0, 0], sizes = [16, 8], strides = [1, 1]} : vector<16x32xf32> to vector<16x8xf32>
    %16 = vector.shape_cast %15 : vector<16x8xf32> to vector<2x8x8xf32>
    %cst_4 = arith.constant dense<0.000000e+00> : vector<2x8x8xf32>
    %17 = tpu.matmul %12, %14, %cst_4 {dimension_numbers = #tpu.dot_dimension_numbers<[2], [2], [1], [1], [0, 0, 0, 1, 1, 1], [0], [0]>} : vector<2x8x8xf32>, vector<2x8x8xf32>, vector<2x8x8xf32> -> vector<2x8x8xf32>
    %cst_5 = arith.constant 0.353553385 : f32
    %18 = vector.broadcast %cst_5 : f32 to vector<2x8x8xf32>
    %19 = arith.mulf %17, %18 : vector<2x8x8xf32>
    %cst_6 = arith.constant -1.000000e+30 : f32
    %20 = vector.shape_cast %10 : vector<1x8x8xi1> to vector<1x8x8xi1>
    %21 = vector.broadcast %20 : vector<1x8x8xi1> to vector<2x8x8xi1>
    %22 = vector.broadcast %cst_6 : f32 to vector<2x8x8xf32>
    %23 = arith.select %21, %19, %22 : vector<2x8x8xi1>, vector<2x8x8xf32>
    %cst_7 = arith.constant dense<0xFF800000> : vector<2x8xf32>
    %24 = vector.multi_reduction <maximumf>, %23, %cst_7 [2] : vector<2x8x8xf32> to vector<2x8xf32>
    %25 = vector.shape_cast %24 : vector<2x8xf32> to vector<2x8x1xf32>
    %26 = vector.broadcast %25 : vector<2x8x1xf32> to vector<2x8x8xf32>
    %27 = arith.subf %23, %26 : vector<2x8x8xf32>
    %28 = math.exp %27 : vector<2x8x8xf32>
    %cst_8 = arith.constant dense<0.000000e+00> : vector<2x8xf32>
    %29 = vector.multi_reduction <add>, %28, %cst_8 [2] : vector<2x8x8xf32> to vector<2x8xf32>
    %30 = vector.shape_cast %29 : vector<2x8xf32> to vector<2x8x1xf32>
    %31 = tpu.reciprocal %30 {approx = true} : vector<2x8x1xf32> -> vector<2x8x1xf32>
    %32 = vector.broadcast %31 : vector<2x8x1xf32> to vector<2x8x8xf32>
    %33 = arith.mulf %28, %32 : vector<2x8x8xf32>
    %cst_9 = arith.constant dense<0.000000e+00> : vector<2x8x8xf32>
    %34 = tpu.matmul %33, %16, %cst_9 {dimension_numbers = #tpu.dot_dimension_numbers<[2], [1], [1], [2], [0, 0, 0, 1, 1, 2], [0], [0]>} : vector<2x8x8xf32>, vector<2x8x8xf32>, vector<2x8x8xf32> -> vector<2x8x8xf32>
    %35 = vector.shape_cast %34 : vector<2x8x8xf32> to vector<16x8xf32>
    %c0_10 = arith.constant 0 : index
    %c0_11 = arith.constant 0 : index
    %36 = vector.load %arg6[%c0_10, %c0_11] : memref<16x32xf32, #tpu.memory_space<vmem>>, vector<16x8xf32>
    tpu.vector_store %arg6[%c0_10, %c0_11], %35 {strides = array<i32>} : memref<16x32xf32, #tpu.memory_space<vmem>>, vector<16x8xf32>,
    %37 = vector.extract_strided_slice %4 {offsets = [0, 8], sizes = [16, 8], strides = [1, 1]} : vector<16x32xf32> to vector<16x8xf32>
    %38 = vector.shape_cast %37 : vector<16x8xf32> to vector<2x8x8xf32>
    %39 = vector.extract_strided_slice %5 {offsets = [0, 8], sizes = [16, 8], strides = [1, 1]} : vector<16x32xf32> to vector<16x8xf32>
    %40 = vector.shape_cast %39 : vector<16x8xf32> to vector<2x8x8xf32>
    %41 = vector.extract_strided_slice %6 {offsets = [0, 8], sizes = [16, 8], strides = [1, 1]} : vector<16x32xf32> to vector<16x8xf32>
    %42 = vector.shape_cast %41 : vector<16x8xf32> to vector<2x8x8xf32>
    %cst_12 = arith.constant dense<0.000000e+00> : vector<2x8x8xf32>
    %43 = tpu.matmul %38, %40, %cst_12 {dimension_numbers = #tpu.dot_dimension_numbers<[2], [2], [1], [1], [0, 0, 0, 1, 1, 1], [0], [0]>} : vector<2x8x8xf32>, vector<2x8x8xf32>, vector<2x8x8xf32> -> vector<2x8x8xf32>
    %cst_13 = arith.constant 0.353553385 : f32
    %44 = vector.broadcast %cst_13 : f32 to vector<2x8x8xf32>
    %45 = arith.mulf %43, %44 : vector<2x8x8xf32>
    %cst_14 = arith.constant -1.000000e+30 : f32
    %46 = vector.shape_cast %10 : vector<1x8x8xi1> to vector<1x8x8xi1>
    %47 = vector.broadcast %46 : vector<1x8x8xi1> to vector<2x8x8xi1>
    %48 = vector.broadcast %cst_14 : f32 to vector<2x8x8xf32>
    %49 = arith.select %47, %45, %48 : vector<2x8x8xi1>, vector<2x8x8xf32>
    %cst_15 = arith.constant dense<0xFF800000> : vector<2x8xf32>
    %50 = vector.multi_reduction <maximumf>, %49, %cst_15 [2] : vector<2x8x8xf32> to vector<2x8xf32>
    %51 = vector.shape_cast %50 : vector<2x8xf32> to vector<2x8x1xf32>
    %52 = vector.broadcast %51 : vector<2x8x1xf32> to vector<2x8x8xf32>
    %53 = arith.subf %49, %52 : vector<2x8x8xf32>
    %54 = math.exp %53 : vector<2x8x8xf32>
    %cst_16 = arith.constant dense<0.000000e+00> : vector<2x8xf32>
    %55 = vector.multi_reduction <add>, %54, %cst_16 [2] : vector<2x8x8xf32> to vector<2x8xf32>
    %56 = vector.shape_cast %55 : vector<2x8xf32> to vector<2x8x1xf32>
    %57 = tpu.reciprocal %56 {approx = true} : vector<2x8x1xf32> -> vector<2x8x1xf32>
    %58 = vector.broadcast %57 : vector<2x8x1xf32> to vector<2x8x8xf32>
    %59 = arith.mulf %54, %58 : vector<2x8x8xf32>
    %cst_17 = arith.constant dense<0.000000e+00> : vector<2x8x8xf32>
    %60 = tpu.matmul %59, %42, %cst_17 {dimension_numbers = #tpu.dot_dimension_numbers<[2], [1], [1], [2], [0, 0, 0, 1, 1, 2], [0], [0]>} : vector<2x8x8xf32>, vector<2x8x8xf32>, vector<2x8x8xf32> -> vector<2x8x8xf32>
    %61 = vector.shape_cast %60 : vector<2x8x8xf32> to vector<16x8xf32>
    %c0_18 = arith.constant 0 : index
    %c8 = arith.constant 8 : index
    %62 = vector.load %arg6[%c0_18, %c8] : memref<16x32xf32, #tpu.memory_space<vmem>>, vector<16x8xf32>
    tpu.vector_store %arg6[%c0_18, %c8], %61 {strides = array<i32>} : memref<16x32xf32, #tpu.memory_space<vmem>>, vector<16x8xf32>,
    %63 = vector.extract_strided_slice %4 {offsets = [0, 16], sizes = [16, 8], strides = [1, 1]} : vector<16x32xf32> to vector<16x8xf32>
    %64 = vector.shape_cast %63 : vector<16x8xf32> to vector<2x8x8xf32>
    %65 = vector.extract_strided_slice %5 {offsets = [0, 16], sizes = [16, 8], strides = [1, 1]} : vector<16x32xf32> to vector<16x8xf32>
    %66 = vector.shape_cast %65 : vector<16x8xf32> to vector<2x8x8xf32>
    %67 = vector.extract_strided_slice %6 {offsets = [0, 16], sizes = [16, 8], strides = [1, 1]} : vector<16x32xf32> to vector<16x8xf32>
    %68 = vector.shape_cast %67 : vector<16x8xf32> to vector<2x8x8xf32>
    %cst_19 = arith.constant dense<0.000000e+00> : vector<2x8x8xf32>
    %69 = tpu.matmul %64, %66, %cst_19 {dimension_numbers = #tpu.dot_dimension_numbers<[2], [2], [1], [1], [0, 0, 0, 1, 1, 1], [0], [0]>} : vector<2x8x8xf32>, vector<2x8x8xf32>, vector<2x8x8xf32> -> vector<2x8x8xf32>
    %cst_20 = arith.constant 0.353553385 : f32
    %70 = vector.broadcast %cst_20 : f32 to vector<2x8x8xf32>
    %71 = arith.mulf %69, %70 : vector<2x8x8xf32>
    %cst_21 = arith.constant -1.000000e+30 : f32
    %72 = vector.shape_cast %10 : vector<1x8x8xi1> to vector<1x8x8xi1>
    %73 = vector.broadcast %72 : vector<1x8x8xi1> to vector<2x8x8xi1>
    %74 = vector.broadcast %cst_21 : f32 to vector<2x8x8xf32>
    %75 = arith.select %73, %71, %74 : vector<2x8x8xi1>, vector<2x8x8xf32>
    %cst_22 = arith.constant dense<0xFF800000> : vector<2x8xf32>
    %76 = vector.multi_reduction <maximumf>, %75, %cst_22 [2] : vector<2x8x8xf32> to vector<2x8xf32>
    %77 = vector.shape_cast %76 : vector<2x8xf32> to vector<2x8x1xf32>
    %78 = vector.broadcast %77 : vector<2x8x1xf32> to vector<2x8x8xf32>
    %79 = arith.subf %75, %78 : vector<2x8x8xf32>
    %80 = math.exp %79 : vector<2x8x8xf32>
    %cst_23 = arith.constant dense<0.000000e+00> : vector<2x8xf32>
    %81 = vector.multi_reduction <add>, %80, %cst_23 [2] : vector<2x8x8xf32> to vector<2x8xf32>
    %82 = vector.shape_cast %81 : vector<2x8xf32> to vector<2x8x1xf32>
    %83 = tpu.reciprocal %82 {approx = true} : vector<2x8x1xf32> -> vector<2x8x1xf32>
    %84 = vector.broadcast %83 : vector<2x8x1xf32> to vector<2x8x8xf32>
    %85 = arith.mulf %80, %84 : vector<2x8x8xf32>
    %cst_24 = arith.constant dense<0.000000e+00> : vector<2x8x8xf32>
    %86 = tpu.matmul %85, %68, %cst_24 {dimension_numbers = #tpu.dot_dimension_numbers<[2], [1], [1], [2], [0, 0, 0, 1, 1, 2], [0], [0]>} : vector<2x8x8xf32>, vector<2x8x8xf32>, vector<2x8x8xf32> -> vector<2x8x8xf32>
    %87 = vector.shape_cast %86 : vector<2x8x8xf32> to vector<16x8xf32>
    %c0_25 = arith.constant 0 : index
    %c16 = arith.constant 16 : index
    %88 = vector.load %arg6[%c0_25, %c16] : memref<16x32xf32, #tpu.memory_space<vmem>>, vector<16x8xf32>
    tpu.vector_store %arg6[%c0_25, %c16], %87 {strides = array<i32>} : memref<16x32xf32, #tpu.memory_space<vmem>>, vector<16x8xf32>,
    %89 = vector.extract_strided_slice %4 {offsets = [0, 24], sizes = [16, 8], strides = [1, 1]} : vector<16x32xf32> to vector<16x8xf32>
    %90 = vector.shape_cast %89 : vector<16x8xf32> to vector<2x8x8xf32>
    %91 = vector.extract_strided_slice %5 {offsets = [0, 24], sizes = [16, 8], strides = [1, 1]} : vector<16x32xf32> to vector<16x8xf32>
    %92 = vector.shape_cast %91 : vector<16x8xf32> to vector<2x8x8xf32>
    %93 = vector.extract_strided_slice %6 {offsets = [0, 24], sizes = [16, 8], strides = [1, 1]} : vector<16x32xf32> to vector<16x8xf32>
    %94 = vector.shape_cast %93 : vector<16x8xf32> to vector<2x8x8xf32>
    %cst_26 = arith.constant dense<0.000000e+00> : vector<2x8x8xf32>
    %95 = tpu.matmul %90, %92, %cst_26 {dimension_numbers = #tpu.dot_dimension_numbers<[2], [2], [1], [1], [0, 0, 0, 1, 1, 1], [0], [0]>} : vector<2x8x8xf32>, vector<2x8x8xf32>, vector<2x8x8xf32> -> vector<2x8x8xf32>
    %cst_27 = arith.constant 0.353553385 : f32
    %96 = vector.broadcast %cst_27 : f32 to vector<2x8x8xf32>
    %97 = arith.mulf %95, %96 : vector<2x8x8xf32>
    %cst_28 = arith.constant -1.000000e+30 : f32
    %98 = vector.shape_cast %10 : vector<1x8x8xi1> to vector<1x8x8xi1>
    %99 = vector.broadcast %98 : vector<1x8x8xi1> to vector<2x8x8xi1>
    %100 = vector.broadcast %cst_28 : f32 to vector<2x8x8xf32>
    %101 = arith.select %99, %97, %100 : vector<2x8x8xi1>, vector<2x8x8xf32>
    %cst_29 = arith.constant dense<0xFF800000> : vector<2x8xf32>
    %102 = vector.multi_reduction <maximumf>, %101, %cst_29 [2] : vector<2x8x8xf32> to vector<2x8xf32>
    %103 = vector.shape_cast %102 : vector<2x8xf32> to vector<2x8x1xf32>
    %104 = vector.broadcast %103 : vector<2x8x1xf32> to vector<2x8x8xf32>
    %105 = arith.subf %101, %104 : vector<2x8x8xf32>
    %106 = math.exp %105 : vector<2x8x8xf32>
    %cst_30 = arith.constant dense<0.000000e+00> : vector<2x8xf32>
    %107 = vector.multi_reduction <add>, %106, %cst_30 [2] : vector<2x8x8xf32> to vector<2x8xf32>
    %108 = vector.shape_cast %107 : vector<2x8xf32> to vector<2x8x1xf32>
    %109 = tpu.reciprocal %108 {approx = true} : vector<2x8x1xf32> -> vector<2x8x1xf32>
    %110 = vector.broadcast %109 : vector<2x8x1xf32> to vector<2x8x8xf32>
    %111 = arith.mulf %106, %110 : vector<2x8x8xf32>
    %cst_31 = arith.constant dense<0.000000e+00> : vector<2x8x8xf32>
    %112 = tpu.matmul %111, %94, %cst_31 {dimension_numbers = #tpu.dot_dimension_numbers<[2], [1], [1], [2], [0, 0, 0, 1, 1, 2], [0], [0]>} : vector<2x8x8xf32>, vector<2x8x8xf32>, vector<2x8x8xf32> -> vector<2x8x8xf32>
    %113 = vector.shape_cast %112 : vector<2x8x8xf32> to vector<16x8xf32>
    %c0_32 = arith.constant 0 : index
    %c24 = arith.constant 24 : index
    %114 = vector.load %arg6[%c0_32, %c24] : memref<16x32xf32, #tpu.memory_space<vmem>>, vector<16x8xf32>
    tpu.vector_store %arg6[%c0_32, %c24], %113 {strides = array<i32>} : memref<16x32xf32, #tpu.memory_space<vmem>>, vector<16x8xf32>,
    %c0_33 = arith.constant 0 : index
    %c0_34 = arith.constant 0 : index
    %115 = vector.load %arg6[%c0_33, %c0_34] : memref<16x32xf32, #tpu.memory_space<vmem>>, vector<16x32xf32>
    %c0_35 = arith.constant 0 : index
    %c0_36 = arith.constant 0 : index
    %116 = vector.load %arg3[%c0_35, %c0_36] : memref<32x32xf32, #tpu.memory_space<vmem>>, vector<32x32xf32>
    %cst_37 = arith.constant dense<0.000000e+00> : vector<16x32xf32>
    %117 = tpu.matmul %115, %116, %cst_37 {dimension_numbers = #tpu.dot_dimension_numbers<[1], [0], [0], [1], [0, 0, 1, 1], [], []>} : vector<16x32xf32>, vector<32x32xf32>, vector<16x32xf32> -> vector<16x32xf32>
    %c0_38 = arith.constant 0 : index
    %c0_39 = arith.constant 0 : index
    %118 = vector.load %arg4[%c0_38, %c0_39] : memref<1x32xf32, #tpu.memory_space<vmem>>, vector<1x32xf32>
    %119 = vector.broadcast %118 : vector<1x32xf32> to vector<16x32xf32>
    %120 = arith.addf %117, %119 : vector<16x32xf32>
    %121 = vector.shape_cast %120 : vector<16x32xf32> to vector<2x8x32xf32>
    %c0_40 = arith.constant 0 : index
    %c0_41 = arith.constant 0 : index
    %c0_42 = arith.constant 0 : index
    %122 = vector.load %arg5[%c0_40, %c0_41, %c0_42] : memref<2x8x32xf32, #tpu.memory_space<vmem>>, vector<2x8x32xf32>
    tpu.vector_store %arg5[%c0_40, %c0_41, %c0_42], %121 {strides = array<i32>} : memref<2x8x32xf32, #tpu.memory_space<vmem>>, vector<2x8x32xf32>,
    return
  }
  func.func @transform_0(%arg0: i32) -> (i32, i32, i32) {
    %c0_i32 = arith.constant 0 : i32
    %c0_i32_0 = arith.constant 0 : i32
    %c0_i32_1 = arith.constant 0 : i32
    return %arg0, %c0_i32, %c0_i32_0 : i32, i32, i32
  }
  func.func @transform_1(%arg0: i32) -> (i32, i32) {
    %c0_i32 = arith.constant 0 : i32
    %c0_i32_0 = arith.constant 0 : i32
    %c0_i32_1 = arith.constant 0 : i32
    return %c0_i32, %c0_i32_0 : i32, i32
  }
  func.func @transform_2(%arg0: i32) -> (i32, i32) {
    %c0_i32 = arith.constant 0 : i32
    %c0_i32_0 = arith.constant 0 : i32
    %c0_i32_1 = arith.constant 0 : i32
    return %c0_i32, %c0_i32_0 : i32, i32
  }
  func.func @transform_3(%arg0: i32) -> (i32, i32) {
    %c0_i32 = arith.constant 0 : i32
    %c0_i32_0 = arith.constant 0 : i32
    %c0_i32_1 = arith.constant 0 : i32
    return %c0_i32, %c0_i32_0 : i32, i32
  }
  func.func @transform_4(%arg0: i32) -> (i32, i32, i32) {
    %c0_i32 = arith.constant 0 : i32
    %c0_i32_0 = arith.constant 0 : i32
    %c0_i32_1 = arith.constant 0 : i32
    return %arg0, %c0_i32, %c0_i32_0 : i32, i32, i32
  }
}

</mosaic_0001>

<llo_original>
// kernel: tpu_custom_call.1
$region0: #{tpu_custom_call.1}
  #allocation0 [shape = 'u32[]', space=smem, size = 0x4, offset = 0x4, fixed_abs, tag = 'smem constant byte address 0x4 - core index']
  #allocation1 [shape = 'u32[72,128]{1,0:T(1,128)}', space=vmem, size = 0x9000, scoped, tag = 'internal scratch']
  #allocation2 [shape = 'f32[16,32]{1,0:T(8,128)}', space=vmem, size = 0x2000, scoped, tag = 'scratch operand']
  %s0 = inlined_call_operand.hbm [shape: f32[2,8,32], index: 0, kind: input, shape index: {}]
  %s1 = inlined_call_operand.hbm [shape: f32[32,96], index: 1, kind: input, shape index: {}]
  %s2 = inlined_call_operand.hbm [shape: f32[32,32], index: 2, kind: input, shape index: {}]
  %s3 = inlined_call_operand.vmem [shape: f32[1,32], index: 3, kind: input, shape index: {}]
  %s4 = inlined_call_operand.hbm [shape: f32[2,8,32], index: 4, kind: output, shape index: {}]
  %s5 = sld [smem:[#allocation0]]
  $region38: #{tpu_custom_call.1} parent=0
    _
  %s7 = ssub.s32 1, %s5
  %s8 = scalar_select 0, %s7, %s5
  $region1: #{tpu_custom_call.1} parent=0
    #allocation3 [shape = 'u8[8192]{0}', space=vmem, size = 0x2000, scoped, tag = 'input window, operand 0, single buffered']
    #allocation4 [shape = 's32[1]{0}', space=sflag, size = 0x4, scoped, tag = 'scoped memory for tpu_custom_call.1']
    #allocation5 [shape = 's32[1]{0}', space=sflag, size = 0x4, scoped, tag = 'scoped memory for tpu_custom_call.1']
    #allocation6 [shape = 'u8[16384]{0}', space=vmem, size = 0x4000, scoped, tag = 'input window, operand 1, single buffered']
    #allocation7 [shape = 's32[1]{0}', space=sflag, size = 0x4, scoped, tag = 'scoped memory for tpu_custom_call.1']
    #allocation8 [shape = 'u8[16384]{0}', space=vmem, size = 0x4000, scoped, tag = 'input window, operand 2, single buffered']
    #allocation9 [shape = 'u8[8192]{0}', space=vmem, size = 0x2000, scoped, tag = 'output window, operand 0, single buffered']
    %9 = vsyncpa [#allocation4], 0
    %10 = vsyncpa [#allocation7], 0
    %11 = vsyncpa [#allocation5], 0
    // Predicated region
    $region2: #{tpu_custom_call.1} parent=1 // pred_check
      _
    $region3: #{tpu_custom_call.1} parent=1 // pred_check_branch
      %13 = sbr.rel (0) target = $region5
    $region4: #{tpu_custom_call.1} parent=1 // pred_region
      %15 = vsyncadd [#allocation4], 0
      %s16 = sshll.u32 %s0, 4
      %s17 = int_to_ptr.hbm [resolvable:$true] %s16
      %s18 = sshll.u32 [#allocation3], 4
      %s19 = int_to_ptr.vmem [resolvable:$true] %s18
      %24 = dma.hbm_to_vmem [thread:$0]  %s17, 256, %s19, [#allocation4], 128, 128, 8
    $region5: #{tpu_custom_call.1} parent=1 // pred_fallthru
      _
    // Predicated region
    $region6: #{tpu_custom_call.1} parent=1 // pred_check
      _
    $region7: #{tpu_custom_call.1} parent=1 // pred_check_branch
      %26 = sbr.rel (0) target = $region9
    $region8: #{tpu_custom_call.1} parent=1 // pred_region
      %28 = vsyncadd [#allocation7], 0
      %s29 = sshll.u32 %s1, 4
      %s30 = int_to_ptr.hbm [resolvable:$true] %s29
      %s31 = sshll.u32 [#allocation6], 4
      %s32 = int_to_ptr.vmem [resolvable:$true] %s31
      %37 = dma.hbm_to_vmem [thread:$0]  %s30, 512, %s32, [#allocation7], 128, 128, 8
    $region9: #{tpu_custom_call.1} parent=1 // pred_fallthru
      _
    // Predicated region
    $region10: #{tpu_custom_call.1} parent=1 // pred_check
      _
    $region11: #{tpu_custom_call.1} parent=1 // pred_check_branch
      %39 = sbr.rel (0) target = $region13
    $region12: #{tpu_custom_call.1} parent=1 // pred_region
      %41 = vsyncadd [#allocation7], 0
      %s42 = sshll.u32 %s2, 4
      %s43 = int_to_ptr.hbm [resolvable:$true] %s42
      %s44 = sshll.u32 [#allocation8], 4
      %s45 = int_to_ptr.vmem [resolvable:$true] %s44
      %50 = dma.hbm_to_vmem [thread:$0]  %s43, 512, %s45, [#allocation7], 128, 128, 8
    $region13: #{tpu_custom_call.1} parent=1 // pred_fallthru
      _
    // Predicated region
    $region14: #{tpu_custom_call.1} parent=1 // pred_check
      _
    $region15: #{tpu_custom_call.1} parent=1 // pred_check_branch
      %52 = sbr.rel (0) target = $region17
    $region16: #{tpu_custom_call.1} parent=1 // pred_region
      _
    $region17: #{tpu_custom_call.1} parent=1 // pred_fallthru
      _
    // Predicated region
    $region18: #{tpu_custom_call.1} parent=1 // pred_check
      _
    $region19: #{tpu_custom_call.1} parent=1 // pred_check_branch
      %54 = sbr.rel (0) target = $region21
    $region20: #{tpu_custom_call.1} parent=1 // pred_region
      %56 = dma.done [#allocation4], 256
    $region21: #{tpu_custom_call.1} parent=1 // pred_fallthru
      _
    // Predicated region
    $region22: #{tpu_custom_call.1} parent=1 // pred_check
      _
    $region23: #{tpu_custom_call.1} parent=1 // pred_check_branch
      %58 = sbr.rel (0) target = $region25
    $region24: #{tpu_custom_call.1} parent=1 // pred_region
      %60 = dma.done [#allocation7], 512
    $region25: #{tpu_custom_call.1} parent=1 // pred_fallthru
      _
    // Predicated region
    $region26: #{tpu_custom_call.1} parent=1 // pred_check
      _
    $region27: #{tpu_custom_call.1} parent=1 // pred_check_branch
      %62 = sbr.rel (0) target = $region29
    $region28: #{tpu_custom_call.1} parent=1 // pred_region
      %64 = dma.done [#allocation7], 512
    $region29: #{tpu_custom_call.1} parent=1 // pred_fallthru
      _
    %v65 = vld [vmem:[#allocation3] sm:$0xff]
    %v66 = vld [vmem:[#allocation3 + $0x8] sm:$0xff]
    %v67 = vld [vmem:[#allocation6] sm:$0xff]
    %v68 = vld [vmem:[#allocation6 + $0x8] sm:$0xff]
    %v69 = vld [vmem:[#allocation6 + $0x10] sm:$0xff]
    %v70 = vld [vmem:[#allocation6 + $0x18] sm:$0xff]
    %vm71 = vcmask 261120
    %v73 = vsel %vm71, %v65, 0
    %v76 = vsel %vm71, %v66, 0
    %78 = vmatpush.msra.mxu0 0.0
    %79 = vmatpush.msra.mxu0 0.0
    %80 = vmatpush.msra.mxu0 0.0
    %81 = vmatpush.msra.mxu0 0.0
    %82 = vmatpush.msra.mxu0 0.0
    %83 = vmatpush.msra.mxu0 0.0
    %84 = vmatpush.msra.mxu0 0.0
    %85 = vmatpush.msra.mxu0 0.0
    %86 = vmatpush.msra.mxu0 0.0
    %87 = vmatpush.msra.mxu0 0.0
    %88 = vmatpush.msra.mxu0 0.0
    %89 = vmatpush.msra.mxu0 0.0
    %90 = vmatpush.msra.mxu0 %v70
    %91 = vmatpush.msra.mxu0 %v69
    %92 = vmatpush.msra.mxu0 %v68
    %93 = vmatpush.msra.mxu0 %v67
    %94 = vmatmul.f32.gmra.mxu0 %v73
    %v95 = vpop.f32.mrf.mxu0
    %v96 = vadd.f32 0.0, %v95
    %97 = vmatmul.f32.gmra.mxu0 %v76
    %v98 = vpop.f32.mrf.mxu0
    %v99 = vadd.f32 0.0, %v98
    %100 = vdwg.mxu0
    %v101 = vlaneseq
    %v102 = vshrl.u32 %v101, 7
    %v103 = vlaneseq
    %v104 = vand.u32 %v103, 127
    %vm105 = vcmp.le.s32.totalorder %v104, %v102
    %107 = vrot.lane.b32.xlu0 %v96, 96
    %v108 = vpop.permute.xlu0 %107
    %vm109 = vcmask 64512
    %v110 = vsel %vm109, %v96, 0
    %v112 = vsel %vm109, %v108, 0
    %114 = vmatpush.xpose.msra.mxu0 0.0
    %115 = vmatpush.xpose.msra.mxu0 0.0
    %116 = vmatpush.xpose.msra.mxu0 0.0
    %117 = vmatpush.xpose.msra.mxu0 0.0
    %118 = vmatpush.xpose.msra.mxu0 0.0
    %119 = vmatpush.xpose.msra.mxu0 0.0
    %120 = vmatpush.xpose.msra.mxu0 0.0
    %121 = vmatpush.xpose.msra.mxu0 0.0
    %122 = vmatpush.xpose.msra.mxu0 0.0
    %123 = vmatpush.xpose.msra.mxu0 0.0
    %124 = vmatpush.xpose.msra.mxu0 0.0
    %125 = vmatpush.xpose.msra.mxu0 0.0
    %126 = vmatpush.xpose.msra.mxu0 0.0
    %127 = vmatpush.xpose.msra.mxu0 0.0
    %128 = vmatpush.xpose.msra.mxu0 0.0
    %129 = vmatpush.xpose.msra.mxu0 %v112
    %130 = vmatmul.f32.gmra.mxu0 %v110
    %v131 = vpop.f32.mrf.mxu0
    %v132 = vadd.f32 0.0, %v131
    %133 = vdwg.mxu0
    %135 = vrot.lane.b32.xlu0 %v99, 96
    %v136 = vpop.permute.xlu0 %135
    %v137 = vsel %vm109, %v99, 0
    %v139 = vsel %vm109, %v136, 0
    %141 = vmatpush.xpose.msra.mxu0 0.0
    %142 = vmatpush.xpose.msra.mxu0 0.0
    %143 = vmatpush.xpose.msra.mxu0 0.0
    %144 = vmatpush.xpose.msra.mxu0 0.0
    %145 = vmatpush.xpose.msra.mxu0 0.0
    %146 = vmatpush.xpose.msra.mxu0 0.0
    %147 = vmatpush.xpose.msra.mxu0 0.0
    %148 = vmatpush.xpose.msra.mxu0 0.0
    %149 = vmatpush.xpose.msra.mxu0 0.0
    %150 = vmatpush.xpose.msra.mxu0 0.0
    %151 = vmatpush.xpose.msra.mxu0 0.0
    %152 = vmatpush.xpose.msra.mxu0 0.0
    %153 = vmatpush.xpose.msra.mxu0 0.0
    %154 = vmatpush.xpose.msra.mxu0 0.0
    %155 = vmatpush.xpose.msra.mxu0 0.0
    %156 = vmatpush.xpose.msra.mxu0 %v139
    %157 = vmatmul.f32.gmra.mxu0 %v137
    %v158 = vpop.f32.mrf.mxu0
    %v159 = vadd.f32 0.0, %v158
    %160 = vdwg.mxu0
    %v161 = vmul.f32 %v132, 0.35355338
    %v162 = vmul.f32 %v159, 0.35355338
    %v163 = vsel %vm105, 1, 0
    %vm164 = vcmp.eq.s32.totalorder %v163, 1
    %v165 = vsel %vm164, %v161, -1e+30
    %v166 = vsel %vm164, %v162, -1e+30
    %v167 = vsel %vm109, %v165, -inf
    %168 = vmax.xlane.f32.xlu0 %v167
    %v169 = vpop.xlane.xlu0 %168
    %v170 = vsel %vm109, %v166, -inf
    %171 = vmax.xlane.f32.xlu0 %v170
    %v172 = vpop.xlane.xlu0 %171
    %v173 = vsub.f32 %v165, %v169
    %v174 = vsub.f32 %v166, %v172
    %v175 = vmul.f32 %v173, 1.442695
    %v176 = vpow.pop %v175
    %v177 = vmul.f32 %v174, 1.442695
    %v178 = vpow.pop %v177
    %v179 = vsel %vm109, %v176, 0.0
    %180 = vadd.xlane.f32.xlu0 %v179
    %v181 = vpop.xlane.xlu0 %180
    %v182 = vsel %vm109, %v178, 0.0
    %183 = vadd.xlane.f32.xlu0 %v182
    %v184 = vpop.xlane.xlu0 %183
    %v185 = vrcp.pop %v181
    %v186 = vrcp.pop %v184
    %v187 = vmul.f32 %v176, %v185
    %v188 = vmul.f32 %v178, %v186
    %189 = vrot.lane.b32.xlu0 %v96, 64
    %v190 = vpop.permute.xlu0 %189
    %v193 = vsel %vm109, %v187, 0
    %195 = vmatpush.msra.mxu0 0.0
    %196 = vmatpush.msra.mxu0 0.0
    %197 = vmatpush.msra.mxu0 0.0
    %198 = vmatpush.msra.mxu0 0.0
    %199 = vmatpush.msra.mxu0 0.0
    %200 = vmatpush.msra.mxu0 0.0
    %201 = vmatpush.msra.mxu0 0.0
    %202 = vmatpush.msra.mxu0 0.0
    %203 = vmatpush.msra.mxu0 0.0
    %204 = vmatpush.msra.mxu0 0.0
    %205 = vmatpush.msra.mxu0 0.0
    %206 = vmatpush.msra.mxu0 0.0
    %207 = vmatpush.msra.mxu0 0.0
    %208 = vmatpush.msra.mxu0 0.0
    %209 = vmatpush.msra.mxu0 0.0
    %210 = vmatpush.msra.mxu0 %v190
    %211 = vmatmul.f32.gmra.mxu0 %v193
    %v212 = vpop.f32.mrf.mxu0
    %v213 = vadd.f32 0.0, %v212
    %214 = vdwg.mxu0
    %215 = vrot.lane.b32.xlu0 %v99, 64
    %v216 = vpop.permute.xlu0 %215
    %v219 = vsel %vm109, %v188, 0
    %221 = vmatpush.msra.mxu0 0.0
    %222 = vmatpush.msra.mxu0 0.0
    %223 = vmatpush.msra.mxu0 0.0
    %224 = vmatpush.msra.mxu0 0.0
    %225 = vmatpush.msra.mxu0 0.0
    %226 = vmatpush.msra.mxu0 0.0
    %227 = vmatpush.msra.mxu0 0.0
    %228 = vmatpush.msra.mxu0 0.0
    %229 = vmatpush.msra.mxu0 0.0
    %230 = vmatpush.msra.mxu0 0.0
    %231 = vmatpush.msra.mxu0 0.0
    %232 = vmatpush.msra.mxu0 0.0
    %233 = vmatpush.msra.mxu0 0.0
    %234 = vmatpush.msra.mxu0 0.0
    %235 = vmatpush.msra.mxu0 0.0
    %236 = vmatpush.msra.mxu0 %v216
    %237 = vmatmul.f32.gmra.mxu0 %v219
    %v238 = vpop.f32.mrf.mxu0
    %v239 = vadd.f32 0.0, %v238
    %240 = vdwg.mxu0
    %241 = vst.msk [vmem:[#allocation2] sm:$0xff] %vm109, %v213
    %242 = vst.msk [vmem:[#allocation2 + $0x8] sm:$0xff] %vm109, %v239
    %243 = vrot.lane.b32.xlu0 %v96, 120
    %v244 = vpop.permute.xlu0 %243
    %245 = vrot.lane.b32.xlu0 %v96, 88
    %v246 = vpop.permute.xlu0 %245
    %v247 = vsel %vm109, %v244, 0
    %v249 = vsel %vm109, %v246, 0
    %251 = vmatpush.xpose.msra.mxu0 0.0
    %252 = vmatpush.xpose.msra.mxu0 0.0
    %253 = vmatpush.xpose.msra.mxu0 0.0
    %254 = vmatpush.xpose.msra.mxu0 0.0
    %255 = vmatpush.xpose.msra.mxu0 0.0
    %256 = vmatpush.xpose.msra.mxu0 0.0
    %257 = vmatpush.xpose.msra.mxu0 0.0
    %258 = vmatpush.xpose.msra.mxu0 0.0
    %259 = vmatpush.xpose.msra.mxu0 0.0
    %260 = vmatpush.xpose.msra.mxu0 0.0
    %261 = vmatpush.xpose.msra.mxu0 0.0
    %262 = vmatpush.xpose.msra.mxu0 0.0
    %263 = vmatpush.xpose.msra.mxu0 0.0
    %264 = vmatpush.xpose.msra.mxu0 0.0
    %265 = vmatpush.xpose.msra.mxu0 0.0
    %266 = vmatpush.xpose.msra.mxu0 %v249
    %267 = vmatmul.f32.gmra.mxu0 %v247
    %v268 = vpop.f32.mrf.mxu0
    %v269 = vadd.f32 0.0, %v268
    %270 = vdwg.mxu0
    %271 = vrot.lane.b32.xlu0 %v99, 120
    %v272 = vpop.permute.xlu0 %271
    %273 = vrot.lane.b32.xlu0 %v99, 88
    %v274 = vpop.permute.xlu0 %273
    %v275 = vsel %vm109, %v272, 0
    %v277 = vsel %vm109, %v274, 0
    %279 = vmatpush.xpose.msra.mxu0 0.0
    %280 = vmatpush.xpose.msra.mxu0 0.0
    %281 = vmatpush.xpose.msra.mxu0 0.0
    %282 = vmatpush.xpose.msra.mxu0 0.0
    %283 = vmatpush.xpose.msra.mxu0 0.0
    %284 = vmatpush.xpose.msra.mxu0 0.0
    %285 = vmatpush.xpose.msra.mxu0 0.0
    %286 = vmatpush.xpose.msra.mxu0 0.0
    %287 = vmatpush.xpose.msra.mxu0 0.0
    %288 = vmatpush.xpose.msra.mxu0 0.0
    %289 = vmatpush.xpose.msra.mxu0 0.0
    %290 = vmatpush.xpose.msra.mxu0 0.0
    %291 = vmatpush.xpose.msra.mxu0 0.0
    %292 = vmatpush.xpose.msra.mxu0 0.0
    %293 = vmatpush.xpose.msra.mxu0 0.0
    %294 = vmatpush.xpose.msra.mxu0 %v277
    %295 = vmatmul.f32.gmra.mxu0 %v275
    %v296 = vpop.f32.mrf.mxu0
    %v297 = vadd.f32 0.0, %v296
    %298 = vdwg.mxu0
    %v299 = vmul.f32 %v269, 0.35355338
    %v300 = vmul.f32 %v297, 0.35355338
    %v301 = vsel %vm164, %v299, -1e+30
    %v302 = vsel %vm164, %v300, -1e+30
    %v303 = vsel %vm109, %v301, -inf
    %304 = vmax.xlane.f32.xlu0 %v303
    %v305 = vpop.xlane.xlu0 %304
    %v306 = vsel %vm109, %v302, -inf
    %307 = vmax.xlane.f32.xlu0 %v306
    %v308 = vpop.xlane.xlu0 %307
    %v309 = vsub.f32 %v301, %v305
    %v310 = vsub.f32 %v302, %v308
    %v311 = vmul.f32 %v309, 1.442695
    %v312 = vpow.pop %v311
    %v313 = vmul.f32 %v310, 1.442695
    %v314 = vpow.pop %v313
    %v315 = vsel %vm109, %v312, 0.0
    %316 = vadd.xlane.f32.xlu0 %v315
    %v317 = vpop.xlane.xlu0 %316
    %v318 = vsel %vm109, %v314, 0.0
    %319 = vadd.xlane.f32.xlu0 %v318
    %v320 = vpop.xlane.xlu0 %319
    %v321 = vrcp.pop %v317
    %v322 = vrcp.pop %v320
    %v323 = vmul.f32 %v312, %v321
    %v324 = vmul.f32 %v314, %v322
    %325 = vrot.lane.b32.xlu0 %v96, 56
    %v326 = vpop.permute.xlu0 %325
    %v329 = vsel %vm109, %v323, 0
    %331 = vmatpush.msra.mxu0 0.0
    %332 = vmatpush.msra.mxu0 0.0
    %333 = vmatpush.msra.mxu0 0.0
    %334 = vmatpush.msra.mxu0 0.0
    %335 = vmatpush.msra.mxu0 0.0
    %336 = vmatpush.msra.mxu0 0.0
    %337 = vmatpush.msra.mxu0 0.0
    %338 = vmatpush.msra.mxu0 0.0
    %339 = vmatpush.msra.mxu0 0.0
    %340 = vmatpush.msra.mxu0 0.0
    %341 = vmatpush.msra.mxu0 0.0
    %342 = vmatpush.msra.mxu0 0.0
    %343 = vmatpush.msra.mxu0 0.0
    %344 = vmatpush.msra.mxu0 0.0
    %345 = vmatpush.msra.mxu0 0.0
    %346 = vmatpush.msra.mxu0 %v326
    %347 = vmatmul.f32.gmra.mxu0 %v329
    %v348 = vpop.f32.mrf.mxu0
    %v349 = vadd.f32 0.0, %v348
    %350 = vdwg.mxu0
    %351 = vrot.lane.b32.xlu0 %v99, 56
    %v352 = vpop.permute.xlu0 %351
    %v355 = vsel %vm109, %v324, 0
    %357 = vmatpush.msra.mxu0 0.0
    %358 = vmatpush.msra.mxu0 0.0
    %359 = vmatpush.msra.mxu0 0.0
    %360 = vmatpush.msra.mxu0 0.0
    %361 = vmatpush.msra.mxu0 0.0
    %362 = vmatpush.msra.mxu0 0.0
    %363 = vmatpush.msra.mxu0 0.0
    %364 = vmatpush.msra.mxu0 0.0
    %365 = vmatpush.msra.mxu0 0.0
    %366 = vmatpush.msra.mxu0 0.0
    %367 = vmatpush.msra.mxu0 0.0
    %368 = vmatpush.msra.mxu0 0.0
    %369 = vmatpush.msra.mxu0 0.0
    %370 = vmatpush.msra.mxu0 0.0
    %371 = vmatpush.msra.mxu0 0.0
    %372 = vmatpush.msra.mxu0 %v352
    %373 = vmatmul.f32.gmra.mxu0 %v355
    %v374 = vpop.f32.mrf.mxu0
    %v375 = vadd.f32 0.0, %v374
    %376 = vdwg.mxu0
    %379 = vrot.lane.b32.xlu0 %v349, 8
    %v380 = vpop.permute.xlu0 %379
    %381 = vrot.lane.b32.xlu0 %v375, 8
    %v382 = vpop.permute.xlu0 %381
    %vm385 = vcmask 130112
    %386 = vst.msk [vmem:[#allocation2] sm:$0xff] %vm385, %v380
    %387 = vst.msk [vmem:[#allocation2 + $0x8] sm:$0xff] %vm385, %v382
    %388 = vrot.lane.b32.xlu0 %v96, 112
    %v389 = vpop.permute.xlu0 %388
    %390 = vrot.lane.b32.xlu0 %v96, 80
    %v391 = vpop.permute.xlu0 %390
    %v392 = vsel %vm109, %v389, 0
    %v394 = vsel %vm109, %v391, 0
    %396 = vmatpush.xpose.msra.mxu0 0.0
    %397 = vmatpush.xpose.msra.mxu0 0.0
    %398 = vmatpush.xpose.msra.mxu0 0.0
    %399 = vmatpush.xpose.msra.mxu0 0.0
    %400 = vmatpush.xpose.msra.mxu0 0.0
    %401 = vmatpush.xpose.msra.mxu0 0.0
    %402 = vmatpush.xpose.msra.mxu0 0.0
    %403 = vmatpush.xpose.msra.mxu0 0.0
    %404 = vmatpush.xpose.msra.mxu0 0.0
    %405 = vmatpush.xpose.msra.mxu0 0.0
    %406 = vmatpush.xpose.msra.mxu0 0.0
    %407 = vmatpush.xpose.msra.mxu0 0.0
    %408 = vmatpush.xpose.msra.mxu0 0.0
    %409 = vmatpush.xpose.msra.mxu0 0.0
    %410 = vmatpush.xpose.msra.mxu0 0.0
    %411 = vmatpush.xpose.msra.mxu0 %v394
    %412 = vmatmul.f32.gmra.mxu0 %v392
    %v413 = vpop.f32.mrf.mxu0
    %v414 = vadd.f32 0.0, %v413
    %415 = vdwg.mxu0
    %416 = vrot.lane.b32.xlu0 %v99, 112
    %v417 = vpop.permute.xlu0 %416
    %418 = vrot.lane.b32.xlu0 %v99, 80
    %v419 = vpop.permute.xlu0 %418
    %v420 = vsel %vm109, %v417, 0
    %v422 = vsel %vm109, %v419, 0
    %424 = vmatpush.xpose.msra.mxu0 0.0
    %425 = vmatpush.xpose.msra.mxu0 0.0
    %426 = vmatpush.xpose.msra.mxu0 0.0
    %427 = vmatpush.xpose.msra.mxu0 0.0
    %428 = vmatpush.xpose.msra.mxu0 0.0
    %429 = vmatpush.xpose.msra.mxu0 0.0
    %430 = vmatpush.xpose.msra.mxu0 0.0
    %431 = vmatpush.xpose.msra.mxu0 0.0
    %432 = vmatpush.xpose.msra.mxu0 0.0
    %433 = vmatpush.xpose.msra.mxu0 0.0
    %434 = vmatpush.xpose.msra.mxu0 0.0
    %435 = vmatpush.xpose.msra.mxu0 0.0
    %436 = vmatpush.xpose.msra.mxu0 0.0
    %437 = vmatpush.xpose.msra.mxu0 0.0
    %438 = vmatpush.xpose.msra.mxu0 0.0
    %439 = vmatpush.xpose.msra.mxu0 %v422
    %440 = vmatmul.f32.gmra.mxu0 %v420
    %v441 = vpop.f32.mrf.mxu0
    %v442 = vadd.f32 0.0, %v441
    %443 = vdwg.mxu0
    %v444 = vmul.f32 %v414, 0.35355338
    %v445 = vmul.f32 %v442, 0.35355338
    %v446 = vsel %vm164, %v444, -1e+30
    %v447 = vsel %vm164, %v445, -1e+30
    %v448 = vsel %vm109, %v446, -inf
    %449 = vmax.xlane.f32.xlu0 %v448
    %v450 = vpop.xlane.xlu0 %449
    %v451 = vsel %vm109, %v447, -inf
    %452 = vmax.xlane.f32.xlu0 %v451
    %v453 = vpop.xlane.xlu0 %452
    %v454 = vsub.f32 %v446, %v450
    %v455 = vsub.f32 %v447, %v453
    %v456 = vmul.f32 %v454, 1.442695
    %v457 = vpow.pop %v456
    %v458 = vmul.f32 %v455, 1.442695
    %v459 = vpow.pop %v458
    %v460 = vsel %vm109, %v457, 0.0
    %461 = vadd.xlane.f32.xlu0 %v460
    %v462 = vpop.xlane.xlu0 %461
    %v463 = vsel %vm109, %v459, 0.0
    %464 = vadd.xlane.f32.xlu0 %v463
    %v465 = vpop.xlane.xlu0 %464
    %v466 = vrcp.pop %v462
    %v467 = vrcp.pop %v465
    %v468 = vmul.f32 %v457, %v466
    %v469 = vmul.f32 %v459, %v467
    %470 = vrot.lane.b32.xlu0 %v96, 48
    %v471 = vpop.permute.xlu0 %470
    %v474 = vsel %vm109, %v468, 0
    %476 = vmatpush.msra.mxu0 0.0
    %477 = vmatpush.msra.mxu0 0.0
    %478 = vmatpush.msra.mxu0 0.0
    %479 = vmatpush.msra.mxu0 0.0
    %480 = vmatpush.msra.mxu0 0.0
    %481 = vmatpush.msra.mxu0 0.0
    %482 = vmatpush.msra.mxu0 0.0
    %483 = vmatpush.msra.mxu0 0.0
    %484 = vmatpush.msra.mxu0 0.0
    %485 = vmatpush.msra.mxu0 0.0
    %486 = vmatpush.msra.mxu0 0.0
    %487 = vmatpush.msra.mxu0 0.0
    %488 = vmatpush.msra.mxu0 0.0
    %489 = vmatpush.msra.mxu0 0.0
    %490 = vmatpush.msra.mxu0 0.0
    %491 = vmatpush.msra.mxu0 %v471
    %492 = vmatmul.f32.gmra.mxu0 %v474
    %v493 = vpop.f32.mrf.mxu0
    %v494 = vadd.f32 0.0, %v493
    %495 = vdwg.mxu0
    %496 = vrot.lane.b32.xlu0 %v99, 48
    %v497 = vpop.permute.xlu0 %496
    %v500 = vsel %vm109, %v469, 0
    %502 = vmatpush.msra.mxu0 0.0
    %503 = vmatpush.msra.mxu0 0.0
    %504 = vmatpush.msra.mxu0 0.0
    %505 = vmatpush.msra.mxu0 0.0
    %506 = vmatpush.msra.mxu0 0.0
    %507 = vmatpush.msra.mxu0 0.0
    %508 = vmatpush.msra.mxu0 0.0
    %509 = vmatpush.msra.mxu0 0.0
    %510 = vmatpush.msra.mxu0 0.0
    %511 = vmatpush.msra.mxu0 0.0
    %512 = vmatpush.msra.mxu0 0.0
    %513 = vmatpush.msra.mxu0 0.0
    %514 = vmatpush.msra.mxu0 0.0
    %515 = vmatpush.msra.mxu0 0.0
    %516 = vmatpush.msra.mxu0 0.0
    %517 = vmatpush.msra.mxu0 %v497
    %518 = vmatmul.f32.gmra.mxu0 %v500
    %v519 = vpop.f32.mrf.mxu0
    %v520 = vadd.f32 0.0, %v519
    %521 = vdwg.mxu0
    %524 = vrot.lane.b32.xlu0 %v494, 16
    %v525 = vpop.permute.xlu0 %524
    %526 = vrot.lane.b32.xlu0 %v520, 16
    %v527 = vpop.permute.xlu0 %526
    %vm530 = vcmask 195712
    %531 = vst.msk [vmem:[#allocation2] sm:$0xff] %vm530, %v525
    %532 = vst.msk [vmem:[#allocation2 + $0x8] sm:$0xff] %vm530, %v527
    %533 = vrot.lane.b32.xlu0 %v96, 104
    %v534 = vpop.permute.xlu0 %533
    %535 = vrot.lane.b32.xlu0 %v96, 72
    %v536 = vpop.permute.xlu0 %535
    %v537 = vsel %vm109, %v534, 0
    %v539 = vsel %vm109, %v536, 0
    %541 = vmatpush.xpose.msra.mxu0 0.0
    %542 = vmatpush.xpose.msra.mxu0 0.0
    %543 = vmatpush.xpose.msra.mxu0 0.0
    %544 = vmatpush.xpose.msra.mxu0 0.0
    %545 = vmatpush.xpose.msra.mxu0 0.0
    %546 = vmatpush.xpose.msra.mxu0 0.0
    %547 = vmatpush.xpose.msra.mxu0 0.0
    %548 = vmatpush.xpose.msra.mxu0 0.0
    %549 = vmatpush.xpose.msra.mxu0 0.0
    %550 = vmatpush.xpose.msra.mxu0 0.0
    %551 = vmatpush.xpose.msra.mxu0 0.0
    %552 = vmatpush.xpose.msra.mxu0 0.0
    %553 = vmatpush.xpose.msra.mxu0 0.0
    %554 = vmatpush.xpose.msra.mxu0 0.0
    %555 = vmatpush.xpose.msra.mxu0 0.0
    %556 = vmatpush.xpose.msra.mxu0 %v539
    %557 = vmatmul.f32.gmra.mxu0 %v537
    %v558 = vpop.f32.mrf.mxu0
    %v559 = vadd.f32 0.0, %v558
    %560 = vdwg.mxu0
    %561 = vrot.lane.b32.xlu0 %v99, 104
    %v562 = vpop.permute.xlu0 %561
    %563 = vrot.lane.b32.xlu0 %v99, 72
    %v564 = vpop.permute.xlu0 %563
    %v565 = vsel %vm109, %v562, 0
    %v567 = vsel %vm109, %v564, 0
    %569 = vmatpush.xpose.msra.mxu0 0.0
    %570 = vmatpush.xpose.msra.mxu0 0.0
    %571 = vmatpush.xpose.msra.mxu0 0.0
    %572 = vmatpush.xpose.msra.mxu0 0.0
    %573 = vmatpush.xpose.msra.mxu0 0.0
    %574 = vmatpush.xpose.msra.mxu0 0.0
    %575 = vmatpush.xpose.msra.mxu0 0.0
    %576 = vmatpush.xpose.msra.mxu0 0.0
    %577 = vmatpush.xpose.msra.mxu0 0.0
    %578 = vmatpush.xpose.msra.mxu0 0.0
    %579 = vmatpush.xpose.msra.mxu0 0.0
    %580 = vmatpush.xpose.msra.mxu0 0.0
    %581 = vmatpush.xpose.msra.mxu0 0.0
    %582 = vmatpush.xpose.msra.mxu0 0.0
    %583 = vmatpush.xpose.msra.mxu0 0.0
    %584 = vmatpush.xpose.msra.mxu0 %v567
    %585 = vmatmul.f32.gmra.mxu0 %v565
    %v586 = vpop.f32.mrf.mxu0
    %v587 = vadd.f32 0.0, %v586
    %588 = vdwg.mxu0
    %v589 = vmul.f32 %v559, 0.35355338
    %v590 = vmul.f32 %v587, 0.35355338
    %v591 = vsel %vm164, %v589, -1e+30
    %v592 = vsel %vm164, %v590, -1e+30
    %v593 = vsel %vm109, %v591, -inf
    %594 = vmax.xlane.f32.xlu0 %v593
    %v595 = vpop.xlane.xlu0 %594
    %v596 = vsel %vm109, %v592, -inf
    %597 = vmax.xlane.f32.xlu0 %v596
    %v598 = vpop.xlane.xlu0 %597
    %v599 = vsub.f32 %v591, %v595
    %v600 = vsub.f32 %v592, %v598
    %v601 = vmul.f32 %v599, 1.442695
    %v602 = vpow.pop %v601
    %v603 = vmul.f32 %v600, 1.442695
    %v604 = vpow.pop %v603
    %v605 = vsel %vm109, %v602, 0.0
    %606 = vadd.xlane.f32.xlu0 %v605
    %v607 = vpop.xlane.xlu0 %606
    %v608 = vsel %vm109, %v604, 0.0
    %609 = vadd.xlane.f32.xlu0 %v608
    %v610 = vpop.xlane.xlu0 %609
    %v611 = vrcp.pop %v607
    %v612 = vrcp.pop %v610
    %v613 = vmul.f32 %v602, %v611
    %v614 = vmul.f32 %v604, %v612
    %615 = vrot.lane.b32.xlu0 %v96, 40
    %v616 = vpop.permute.xlu0 %615
    %v619 = vsel %vm109, %v613, 0
    %621 = vmatpush.msra.mxu0 0.0
    %622 = vmatpush.msra.mxu0 0.0
    %623 = vmatpush.msra.mxu0 0.0
    %624 = vmatpush.msra.mxu0 0.0
    %625 = vmatpush.msra.mxu0 0.0
    %626 = vmatpush.msra.mxu0 0.0
    %627 = vmatpush.msra.mxu0 0.0
    %628 = vmatpush.msra.mxu0 0.0
    %629 = vmatpush.msra.mxu0 0.0
    %630 = vmatpush.msra.mxu0 0.0
    %631 = vmatpush.msra.mxu0 0.0
    %632 = vmatpush.msra.mxu0 0.0
    %633 = vmatpush.msra.mxu0 0.0
    %634 = vmatpush.msra.mxu0 0.0
    %635 = vmatpush.msra.mxu0 0.0
    %636 = vmatpush.msra.mxu0 %v616
    %637 = vmatmul.f32.gmra.mxu0 %v619
    %v638 = vpop.f32.mrf.mxu0
    %v639 = vadd.f32 0.0, %v638
    %640 = vdwg.mxu0
    %641 = vrot.lane.b32.xlu0 %v99, 40
    %v642 = vpop.permute.xlu0 %641
    %v645 = vsel %vm109, %v614, 0
    %647 = vmatpush.msra.mxu0 0.0
    %648 = vmatpush.msra.mxu0 0.0
    %649 = vmatpush.msra.mxu0 0.0
    %650 = vmatpush.msra.mxu0 0.0
    %651 = vmatpush.msra.mxu0 0.0
    %652 = vmatpush.msra.mxu0 0.0
    %653 = vmatpush.msra.mxu0 0.0
    %654 = vmatpush.msra.mxu0 0.0
    %655 = vmatpush.msra.mxu0 0.0
    %656 = vmatpush.msra.mxu0 0.0
    %657 = vmatpush.msra.mxu0 0.0
    %658 = vmatpush.msra.mxu0 0.0
    %659 = vmatpush.msra.mxu0 0.0
    %660 = vmatpush.msra.mxu0 0.0
    %661 = vmatpush.msra.mxu0 0.0
    %662 = vmatpush.msra.mxu0 %v642
    %663 = vmatmul.f32.gmra.mxu0 %v645
    %v664 = vpop.f32.mrf.mxu0
    %v665 = vadd.f32 0.0, %v664
    %666 = vdwg.mxu0
    %669 = vrot.lane.b32.xlu0 %v639, 24
    %v670 = vpop.permute.xlu0 %669
    %671 = vrot.lane.b32.xlu0 %v665, 24
    %v672 = vpop.permute.xlu0 %671
    %vm675 = vcmask 261312
    %676 = vst.msk [vmem:[#allocation2] sm:$0xff] %vm675, %v670
    %677 = vst.msk [vmem:[#allocation2 + $0x8] sm:$0xff] %vm675, %v672
    %v678 = vld [vmem:[#allocation2] sm:$0xff]
    %v679 = vld [vmem:[#allocation2 + $0x8] sm:$0xff]
    %v680 = vld [vmem:[#allocation8] sm:$0xff]
    %v681 = vld [vmem:[#allocation8 + $0x8] sm:$0xff]
    %v682 = vld [vmem:[#allocation8 + $0x10] sm:$0xff]
    %v683 = vld [vmem:[#allocation8 + $0x18] sm:$0xff]
    %v684 = vld [vmem:[%s3] sm:$0x1]
    %v686 = vperm.slane %v684, 0
    %v689 = vsel %vm71, %v678, 0
    %v692 = vsel %vm71, %v679, 0
    %694 = vmatpush.msra.mxu0 0.0
    %695 = vmatpush.msra.mxu0 0.0
    %696 = vmatpush.msra.mxu0 0.0
    %697 = vmatpush.msra.mxu0 0.0
    %698 = vmatpush.msra.mxu0 0.0
    %699 = vmatpush.msra.mxu0 0.0
    %700 = vmatpush.msra.mxu0 0.0
    %701 = vmatpush.msra.mxu0 0.0
    %702 = vmatpush.msra.mxu0 0.0
    %703 = vmatpush.msra.mxu0 0.0
    %704 = vmatpush.msra.mxu0 0.0
    %705 = vmatpush.msra.mxu0 0.0
    %706 = vmatpush.msra.mxu0 %v683
    %707 = vmatpush.msra.mxu0 %v682
    %708 = vmatpush.msra.mxu0 %v681
    %709 = vmatpush.msra.mxu0 %v680
    %710 = vmatmul.f32.gmra.mxu0 %v689
    %v711 = vpop.f32.mrf.mxu0
    %v712 = vadd.f32 %v686, %v711
    %713 = vmatmul.f32.gmra.mxu0 %v692
    %v714 = vpop.f32.mrf.mxu0
    %v715 = vadd.f32 %v686, %v714
    %716 = vdwg.mxu0
    %717 = vst.msk [vmem:[#allocation9] sm:$0xff] %vm71, %v712
    %718 = vst.msk [vmem:[#allocation9 + $0x8] sm:$0xff] %vm71, %v715
    // Predicated region
    $region30: #{tpu_custom_call.1} parent=1 // pred_check
      _
    $region31: #{tpu_custom_call.1} parent=1 // pred_check_branch
      %720 = sbr.rel (0) target = $region33
    $region32: #{tpu_custom_call.1} parent=1 // pred_region
      %722 = vsyncadd [#allocation5], 0
      %s723 = sshll.u32 [#allocation9], 4
      %s724 = int_to_ptr.vmem [resolvable:$true] %s723
      %s725 = sshll.u32 %s4, 4
      %s726 = int_to_ptr.hbm [resolvable:$true] %s725
      %731 = dma.vmem_to_hbm [thread:$0]  %s724, 256, %s726, [#allocation5], 128, 128, 8
    $region33: #{tpu_custom_call.1} parent=1 // pred_fallthru
      _
    // Predicated region
    $region34: #{tpu_custom_call.1} parent=1 // pred_check
      _
    $region35: #{tpu_custom_call.1} parent=1 // pred_check_branch
      %733 = sbr.rel (0) target = $region37
    $region36: #{tpu_custom_call.1} parent=1 // pred_region
      %735 = dma.done [#allocation5], 256
    $region37: #{tpu_custom_call.1} parent=1 // pred_fallthru
      _
    %736 = vsyncpa [#allocation4], 1
    %737 = vsyncpa [#allocation7], 1
    %738 = vsyncpa [#allocation5], 1

</llo_original>
